<compile_context>
chip_gen: v6e
topology: v6e:2x2x1
jax: 0.10.0
libtpu: 0.0.40
codegen_flags: <defaults>
</compile_context>

<pallas_src>
import functools

import jax
import jax.numpy as jnp
from jax.experimental import pallas as pl
from jax.experimental.pallas import tpu as pltpu

# ---- small, TPU-friendly model dims (consistent with the module's forward) ----
EMB_DIM = 32
HID_DIM = 32
N_LAYERS = 2
VOCAB_SIZE = 128
BATCH = 8


def caption_kernel(
    ids_ref,        # (1, B, 1) int32  token ids for this step
    state_ref,      # (B, 4H) f32      packed [h0 | h1 | c0 | c1]  (read at t==0)
    tab0_ref,       # (V, 4H) f32      fused  emb @ W_ih0 + b0  (g cols x2)
    w_ref,          # (4H, 4H) f32     [W_hh0 ; W_ih1 ; W_hh1 ; W_fc1(padded)]
    wfc2_ref,       # (4H, V) f32      W_fc2 with zero rows for the padded lanes
    b_ref,          # (2B, 4H) f32     [b1 ; b_fc1(padded)] pre-broadcast to B rows
    bfc2_ref,       # (B, V) f32       b_fc2 pre-broadcast to B rows
    logits_ref,     # (1, B, V) f32    per-step logits
    state_out_ref,  # (B, 4H) f32      packed final state (written at t==T-1)
    h0_s, h1_s, c0_s, c1_s,            # (B, H) f32 persistent VMEM scratch
    *, hid, vocab,
):
    H = hid
    B = h0_s.shape[0]
    t = pl.program_id(0)

    # ---- t == 0: unpack recurrent state into persistent VMEM scratch ----------
    @pl.when(t == 0)
    def _():
        st = state_ref[...]                              # (B, 4H)
        h0_s[...] = st[:, 0 * H:1 * H]
        h1_s[...] = st[:, 1 * H:2 * H]
        c0_s[...] = st[:, 2 * H:3 * H]
        c1_s[...] = st[:, 3 * H:4 * H]

    def lstm_activations(gates, c):
        # gates: (B, 4H), gate order i,f,g,o.  g columns were pre-scaled by 2
        # offline, so tanh(g) = 2*sigmoid(2g) - 1 comes out of the ONE full-vreg
        # sigmoid (single EUP pass for all four gates).
        sg = jax.nn.sigmoid(gates)
        i = sg[:, 0 * H:1 * H]
        f = sg[:, 1 * H:2 * H]
        g = 2.0 * sg[:, 2 * H:3 * H] - 1.0
        o = sg[:, 3 * H:4 * H]
        c_new = f * c + i * g
        h_new = o * jnp.tanh(c_new)
        return h_new, c_new

    # ---- embedding lookup + layer-0 input projection + b0, fused offline ------
    # gates0_x = onehot @ (emb @ W_ih0 + b0)   (exact row select; dropout = identity)
    ids = ids_ref[0]                                                   # (B, 1) int32
    col = jax.lax.broadcasted_iota(jnp.int32, (B, vocab), 1)           # (B, V)
    onehot = (col == ids).astype(jnp.float32)                          # (B, V)
    gates0 = jnp.dot(onehot, tab0_ref[...], preferred_element_type=jnp.float32)
    gates0 = gates0 + jnp.dot(h0_s[...], w_ref[0:H, :],
                              preferred_element_type=jnp.float32)
    h0n, c0n = lstm_activations(gates0, c0_s[...])
    h0_s[...] = h0n
    c0_s[...] = c0n

    # ---- LSTM layer 1: two small matmuls, bias pre-broadcast (no concat) -------
    gates1 = (jnp.dot(h0n, w_ref[H:2 * H, :], preferred_element_type=jnp.float32)
              + jnp.dot(h1_s[...], w_ref[2 * H:3 * H, :],
                        preferred_element_type=jnp.float32)
              + b_ref[0:B, :])
    h1n, c1n = lstm_activations(gates1, c1_s[...])
    h1_s[...] = h1n
    c1_s[...] = c1n

    # ---- head: fc2(relu(fc1(h1))) on fully lane-dense (8,128) operands ---------
    hfc = jnp.maximum(
        jnp.dot(h1n, w_ref[3 * H:4 * H, :], preferred_element_type=jnp.float32)
        + b_ref[B:2 * B, :], 0.0)                                      # padded lanes stay 0
    logits_ref[0] = (jnp.dot(hfc, wfc2_ref[...], preferred_element_type=jnp.float32)
                     + bfc2_ref[...])

    # ---- last step: single lane-dense packed state writeback (aliased in place) --
    @pl.when(t == pl.num_programs(0) - 1)
    def _():
        state_out_ref[...] = jnp.concatenate([h0n, h1n, c0n, c1n], axis=1)


def _forward_impl(ids_TB, state, packed):
    """T decode steps in one pallas_call; state is packed (B, 4H)."""
    T, B = ids_TB.shape
    H, V = HID_DIM, VOCAB_SIZE
    kernel = functools.partial(caption_kernel, hid=H, vocab=V)
    const2 = lambda t: (0, 0)   # resident slabs: DMA'd once, stay in VMEM

    logits, state_out = pl.pallas_call(
        kernel,
        grid=(T,),
        in_specs=[
            pl.BlockSpec((1, B, 1), lambda t: (t, 0, 0)),     # ids (per step)
            pl.BlockSpec((B, 4 * H), const2),                 # packed state
            pl.BlockSpec((V, 4 * H), const2),                 # fused emb/W_ih0/b0 table
            pl.BlockSpec((4 * H, 4 * H), const2),             # [W_hh0;W_ih1;W_hh1;W_fc1pad]
            pl.BlockSpec((4 * H, V), const2),                 # W_fc2 (padded rows)
            pl.BlockSpec((2 * B, 4 * H), const2),             # [b1;b_fc1pad] pre-broadcast
            pl.BlockSpec((B, V), const2),                     # b_fc2 pre-broadcast
        ],
        out_specs=(
            pl.BlockSpec((1, B, V), lambda t: (t, 0, 0)),     # per-step logits
            pl.BlockSpec((B, 4 * H), const2),                 # packed final state
        ),
        out_shape=(
            jax.ShapeDtypeStruct((T, B, V), jnp.float32),
            jax.ShapeDtypeStruct((B, 4 * H), jnp.float32),
        ),
        scratch_shapes=[pltpu.VMEM((B, H), jnp.float32)] * 4,   # h0, h1, c0, c1
        input_output_aliases={1: 1},                            # state -> state_out
        compiler_params=pltpu.CompilerParams(
            dimension_semantics=("arbitrary",)),                # recurrent carry over t
        cost_estimate=pl.CostEstimate(
            flops=800_000 * T, transcendentals=2_600 * T,
            bytes_accessed=230_000 + 4_200 * T),
    )(
        ids_TB.reshape(T, B, 1).astype(jnp.int32), state,
        packed["tab0"], packed["wslab"], packed["wfc2"],
        packed["bslab"], packed["bfc2"],
    )
    return logits, state_out


# Fast path: packed donated state, in-kernel T loop.
caption_net_scan = jax.jit(_forward_impl, donate_argnums=(1,))


def pack_state(hidden, cell):
    """(N_LAYERS,B,H) hidden/cell stacks -> packed (B,4H) = [h0|h1|c0|c1]."""
    return jnp.concatenate([hidden[0], hidden[1], cell[0], cell[1]], axis=1)


@jax.jit
def caption_net_forward(captions_ix, hidden, cell, packed):
    """Module-parity API: single step, (hidden, cell) stacks in/out.

    For decode loops prefer `caption_net_scan` (packed state, donated, T steps
    inside one kernel); this wrapper only mirrors CaptionNet.forward().
    """
    state = pack_state(hidden, cell)
    logits, state_out = _forward_impl(captions_ix.reshape(1, -1), state, packed)
    H = HID_DIM
    h_out = jnp.stack([state_out[:, 0:H], state_out[:, H:2 * H]])
    c_out = jnp.stack([state_out[:, 2 * H:3 * H], state_out[:, 3 * H:4 * H]])
    return logits[0], h_out, c_out


def _pack_params(p):
    """One-time packing of params into lane-dense kernel slabs.

    Expected layout (real PyTorch nn.LSTM weights must be TRANSPOSED to (in, out)
    and their two biases b_ih + b_hh SUMMED before packing):
      embedding (V,E), w_ih0 (E,4H), w_hh0 (H,4H), b0 (1,4H),
      w_ih1 (H,4H), w_hh1 (H,4H), b1 (1,4H),
      w_fc1 (H,2H), b_fc1 (1,2H), w_fc2 (2H,V), b_fc2 (1,V).
    Gate column order is PyTorch's (i, f, g, o).  The g-gate columns are
    pre-scaled by 2 so the kernel can compute tanh(g) = 2*sigmoid(2g) - 1 from a
    single full-vreg sigmoid.
    """
    H, B = HID_DIM, BATCH

    def scale_g(w):
        return w.at[:, 2 * H:3 * H].multiply(2.0)

    # Fused embedding + layer-0 input projection + layer-0 bias (row-select table).
    tab0 = scale_g(p["embedding"] @ p["w_ih0"] + p["b0"])                 # (V, 4H)
    wslab = jnp.concatenate([
        scale_g(p["w_hh0"]),
        scale_g(p["w_ih1"]),
        scale_g(p["w_hh1"]),
        jnp.pad(p["w_fc1"], ((0, 0), (0, 2 * H))),   # fc1 padded 2H -> 4H (=128) lanes
    ], axis=0)                                                            # (4H, 4H)
    wfc2 = jnp.pad(p["w_fc2"], ((0, 2 * H), (0, 0)))                      # (4H, V)
    bslab = jnp.concatenate([
        jnp.broadcast_to(scale_g(p["b1"]), (B, 4 * H)),
        jnp.broadcast_to(jnp.pad(p["b_fc1"], ((0, 0), (0, 2 * H))), (B, 4 * H)),
    ], axis=0)                                                            # (2B, 4H)
    bfc2 = jnp.broadcast_to(p["b_fc2"], (B, VOCAB_SIZE))                  # (B, V)
    return {"tab0": tab0, "wslab": wslab, "wfc2": wfc2,
            "bslab": bslab, "bfc2": bfc2}


def _reference_forward(captions_ix, hidden, cell, p):
    """Pure-JAX reference mirroring the PyTorch forward (single step)."""
    H = HID_DIM
    x = p["embedding"][captions_ix]          # (B, E); dropout = identity (eval)

    def cell_fn(x_in, h, c, wih, whh, b):
        g = x_in @ wih + h @ whh + b
        i = jax.nn.sigmoid(g[:, 0 * H:1 * H])
        f = jax.nn.sigmoid(g[:, 1 * H:2 * H])
        gg = jnp.tanh(g[:, 2 * H:3 * H])
        o = jax.nn.sigmoid(g[:, 3 * H:4 * H])
        c_new = f * c + i * gg
        return o * jnp.tanh(c_new), c_new

    h0, c0 = cell_fn(x, hidden[0], cell[0], p["w_ih0"], p["w_hh0"], p["b0"])
    h1, c1 = cell_fn(h0, hidden[1], cell[1], p["w_ih1"], p["w_hh1"], p["b1"])
    hid = jnp.maximum(h1 @ p["w_fc1"] + p["b_fc1"], 0.0)
    logits = hid @ p["w_fc2"] + p["b_fc2"]
    return logits, jnp.stack([h0, h1]), jnp.stack([c0, c1])


def _reference_scan(ids_TB, hidden, cell, p):
    logits_all = []
    h, c = hidden, cell
    for t in range(ids_TB.shape[0]):
        lg, h, c = _reference_forward(ids_TB[t], h, c, p)
        logits_all.append(lg)
    return jnp.stack(logits_all), h, c


def _init_params(key):
    ks = jax.random.split(key, 12)
    s = 0.1
    return {
        "embedding": s * jax.random.normal(ks[0], (VOCAB_SIZE, EMB_DIM), jnp.float32),
        # LSTM layer 0 (weights stored transposed (in, out); b = b_ih + b_hh folded)
        "w_ih0": s * jax.random.normal(ks[1], (EMB_DIM, 4 * HID_DIM), jnp.float32),
        "w_hh0": s * jax.random.normal(ks[2], (HID_DIM, 4 * HID_DIM), jnp.float32),
        "b0": s * jax.random.normal(ks[3], (1, 4 * HID_DIM), jnp.float32),
        # LSTM layer 1
        "w_ih1": s * jax.random.normal(ks[4], (HID_DIM, 4 * HID_DIM), jnp.float32),
        "w_hh1": s * jax.random.normal(ks[5], (HID_DIM, 4 * HID_DIM), jnp.float32),
        "b1": s * jax.random.normal(ks[6], (1, 4 * HID_DIM), jnp.float32),
        # head
        "w_fc1": s * jax.random.normal(ks[7], (HID_DIM, 2 * HID_DIM), jnp.float32),
        "b_fc1": s * jax.random.normal(ks[8], (1, 2 * HID_DIM), jnp.float32),
        "w_fc2": s * jax.random.normal(ks[9], (2 * HID_DIM, VOCAB_SIZE), jnp.float32),
        "b_fc2": s * jax.random.normal(ks[10], (1, VOCAB_SIZE), jnp.float32),
    }


if __name__ == "__main__":
    key = jax.random.PRNGKey(0)
    k_tok, k_seq, k_h, k_c, k_p = jax.random.split(key, 5)

    params = _init_params(k_p)
    packed = _pack_params(params)

    captions_ix = jax.random.randint(k_tok, (BATCH,), 0, VOCAB_SIZE, dtype=jnp.int32)
    hidden = 0.1 * jax.random.normal(k_h, (N_LAYERS, BATCH, HID_DIM), jnp.float32)
    cell = 0.1 * jax.random.normal(k_c, (N_LAYERS, BATCH, HID_DIM), jnp.float32)

    SEQ = 8
    ids_seq = jax.random.randint(k_seq, (SEQ, BATCH), 0, VOCAB_SIZE, dtype=jnp.int32)

    # Pure-JAX references (computed first; the kernel fast path donates its state buffer).
    ref_logits, ref_h, ref_c = _reference_forward(captions_ix, hidden, cell, params)
    ref_seq_logits, ref_seq_h, ref_seq_c = _reference_scan(ids_seq, hidden, cell, params)

    # 1) Module-parity single step (matches CaptionNet.forward signature).
    logits, h_out, c_out = caption_net_forward(captions_ix, hidden, cell, packed)
    jax.block_until_ready((logits, h_out, c_out))
    assert logits.shape == (BATCH, VOCAB_SIZE)
    assert h_out.shape == (N_LAYERS, BATCH, HID_DIM)
    assert c_out.shape == (N_LAYERS, BATCH, HID_DIM)
    assert jnp.allclose(logits, ref_logits, atol=1e-4), "logits mismatch"
    assert jnp.allclose(h_out, ref_h, atol=1e-4), "hidden mismatch"
    assert jnp.allclose(c_out, ref_c, atol=1e-4), "cell mismatch"

    # 2) Multi-token fast path: T steps in one kernel, resident weights, donated state.
    H = HID_DIM
    state0 = pack_state(hidden, cell)
    seq_logits, state_fin = caption_net_scan(ids_seq, state0, packed)
    jax.block_until_ready((seq_logits, state_fin))
    assert seq_logits.shape == (SEQ, BATCH, VOCAB_SIZE)
    assert state_fin.shape == (BATCH, 4 * H)
    assert jnp.allclose(seq_logits, ref_seq_logits, atol=2e-4), "seq logits mismatch"
    assert jnp.allclose(state_fin[:, 0:H], ref_seq_h[0], atol=2e-4), "h0 mismatch"
    assert jnp.allclose(state_fin[:, H:2 * H], ref_seq_h[1], atol=2e-4), "h1 mismatch"
    assert jnp.allclose(state_fin[:, 2 * H:3 * H], ref_seq_c[0], atol=2e-4), "c0 mismatch"
    assert jnp.allclose(state_fin[:, 3 * H:4 * H], ref_seq_c[1], atol=2e-4), "c1 mismatch"

    print("KERNEL_OK")
</pallas_src>

<mosaic_0001>
module attributes {stable_mosaic.version = 11 : i64} {
  func.func @caption_kernel(%arg0: i32, %arg1: memref<1x8x1xi32, #tpu.memory_space<vmem>>, %arg2: memref<8x128xf32, #tpu.memory_space<vmem>>, %arg3: memref<128x128xf32, #tpu.memory_space<vmem>>, %arg4: memref<128x128xf32, #tpu.memory_space<vmem>>, %arg5: memref<128x128xf32, #tpu.memory_space<vmem>>, %arg6: memref<16x128xf32, #tpu.memory_space<vmem>>, %arg7: memref<8x128xf32, #tpu.memory_space<vmem>>, %arg8: memref<1x8x128xf32, #tpu.memory_space<vmem>>, %arg9: memref<8x128xf32, #tpu.memory_space<vmem>>, %arg10: memref<8x32xf32, #tpu.memory_space<vmem>>, %arg11: memref<8x32xf32, #tpu.memory_space<vmem>>, %arg12: memref<8x32xf32, #tpu.memory_space<vmem>>, %arg13: memref<8x32xf32, #tpu.memory_space<vmem>>) attributes {dimension_semantics = [#tpu.dimension_semantics<arbitrary>], iteration_bounds = array<i64: 1>, scalar_prefetch = 0 : i64, scratch_operands = 4 : i64, tpu.core_type = #tpu.core_type<tc>, window_params = [{transform_indices = @transform_0, window_bounds = array<i64: 1, 8, 1>}, {pipeline_mode = #tpu.pipeline_mode<synchronous>, transform_indices = @transform_1, window_bounds = array<i64: 8, 128>}, {pipeline_mode = #tpu.pipeline_mode<synchronous>, transform_indices = @transform_2, window_bounds = array<i64: 128, 128>}, {pipeline_mode = #tpu.pipeline_mode<synchronous>, transform_indices = @transform_3, window_bounds = array<i64: 128, 128>}, {pipeline_mode = #tpu.pipeline_mode<synchronous>, transform_indices = @transform_4, window_bounds = array<i64: 128, 128>}, {pipeline_mode = #tpu.pipeline_mode<synchronous>, transform_indices = @transform_5, window_bounds = array<i64: 16, 128>}, {pipeline_mode = #tpu.pipeline_mode<synchronous>, transform_indices = @transform_6, window_bounds = array<i64: 8, 128>}, {transform_indices = @transform_7, window_bounds = array<i64: 1, 8, 128>}, {pipeline_mode = #tpu.pipeline_mode<synchronous>, transform_indices = @transform_8, window_bounds = array<i64: 8, 128>}]} {
    %c0_i32 = arith.constant 0 : i32
    %0 = arith.cmpi eq, %arg0, %c0_i32 : i32
    %1 = arith.extui %0 : i1 to i32
    %c0_i32_0 = arith.constant 0 : i32
    %2 = arith.cmpi ne, %1, %c0_i32_0 : i32
    scf.if %2 {
      %c0_50 = arith.constant 0 : index
      %c0_51 = arith.constant 0 : index
      %82 = vector.load %arg2[%c0_50, %c0_51] : memref<8x128xf32, #tpu.memory_space<vmem>>, vector<8x128xf32>
      %83 = vector.extract_strided_slice %82 {offsets = [0, 0], sizes = [8, 32], strides = [1, 1]} : vector<8x128xf32> to vector<8x32xf32>
      %c0_52 = arith.constant 0 : index
      %c0_53 = arith.constant 0 : index
      %84 = vector.load %arg10[%c0_52, %c0_53] : memref<8x32xf32, #tpu.memory_space<vmem>>, vector<8x32xf32>
      tpu.vector_store %arg10[%c0_52, %c0_53], %83 {strides = array<i32>} : memref<8x32xf32, #tpu.memory_space<vmem>>, vector<8x32xf32>,
      %85 = vector.extract_strided_slice %82 {offsets = [0, 32], sizes = [8, 32], strides = [1, 1]} : vector<8x128xf32> to vector<8x32xf32>
      %c0_54 = arith.constant 0 : index
      %c0_55 = arith.constant 0 : index
      %86 = vector.load %arg11[%c0_54, %c0_55] : memref<8x32xf32, #tpu.memory_space<vmem>>, vector<8x32xf32>
      tpu.vector_store %arg11[%c0_54, %c0_55], %85 {strides = array<i32>} : memref<8x32xf32, #tpu.memory_space<vmem>>, vector<8x32xf32>,
      %87 = vector.extract_strided_slice %82 {offsets = [0, 64], sizes = [8, 32], strides = [1, 1]} : vector<8x128xf32> to vector<8x32xf32>
      %c0_56 = arith.constant 0 : index
      %c0_57 = arith.constant 0 : index
      %88 = vector.load %arg12[%c0_56, %c0_57] : memref<8x32xf32, #tpu.memory_space<vmem>>, vector<8x32xf32>
      tpu.vector_store %arg12[%c0_56, %c0_57], %87 {strides = array<i32>} : memref<8x32xf32, #tpu.memory_space<vmem>>, vector<8x32xf32>,
      %89 = vector.extract_strided_slice %82 {offsets = [0, 96], sizes = [8, 32], strides = [1, 1]} : vector<8x128xf32> to vector<8x32xf32>
      %c0_58 = arith.constant 0 : index
      %c0_59 = arith.constant 0 : index
      %90 = vector.load %arg13[%c0_58, %c0_59] : memref<8x32xf32, #tpu.memory_space<vmem>>, vector<8x32xf32>
      tpu.vector_store %arg13[%c0_58, %c0_59], %89 {strides = array<i32>} : memref<8x32xf32, #tpu.memory_space<vmem>>, vector<8x32xf32>,
    } else {
    }
    %c0 = arith.constant 0 : index
    %c0_1 = arith.constant 0 : index
    %c0_2 = arith.constant 0 : index
    %3 = vector.load %arg1[%c0, %c0_1, %c0_2] : memref<1x8x1xi32, #tpu.memory_space<vmem>>, vector<1x8x1xi32>
    %4 = vector.shape_cast %3 : vector<1x8x1xi32> to vector<8x1xi32>
    %5 = tpu.iota {dimensions = array<i32: 1>} : vector<8x128xi32>
    %6 = vector.broadcast %4 : vector<8x1xi32> to vector<8x128xi32>
    %7 = arith.cmpi eq, %5, %6 : vector<8x128xi32>
    %8 = arith.extui %7 : vector<8x128xi1> to vector<8x128xi32>
    %9 = arith.sitofp %8 : vector<8x128xi32> to vector<8x128xf32>
    %c0_3 = arith.constant 0 : index
    %c0_4 = arith.constant 0 : index
    %10 = vector.load %arg3[%c0_3, %c0_4] : memref<128x128xf32, #tpu.memory_space<vmem>>, vector<128x128xf32>
    %cst = arith.constant dense<0.000000e+00> : vector<8x128xf32>
    %11 = tpu.matmul %9, %10, %cst {dimension_numbers = #tpu.dot_dimension_numbers<[1], [0], [0], [1], [0, 0, 1, 1], [], []>} : vector<8x128xf32>, vector<128x128xf32>, vector<8x128xf32> -> vector<8x128xf32>
    %c0_5 = arith.constant 0 : index
    %c0_6 = arith.constant 0 : index
    %12 = vector.load %arg10[%c0_5, %c0_6] : memref<8x32xf32, #tpu.memory_space<vmem>>, vector<8x32xf32>
    %c0_7 = arith.constant 0 : index
    %c0_8 = arith.constant 0 : index
    %13 = vector.load %arg4[%c0_7, %c0_8] : memref<128x128xf32, #tpu.memory_space<vmem>>, vector<32x128xf32>
    %cst_9 = arith.constant dense<0.000000e+00> : vector<8x128xf32>
    %14 = tpu.matmul %12, %13, %cst_9 {dimension_numbers = #tpu.dot_dimension_numbers<[1], [0], [0], [1], [0, 0, 1, 1], [], []>} : vector<8x32xf32>, vector<32x128xf32>, vector<8x128xf32> -> vector<8x128xf32>
    %15 = arith.addf %11, %14 : vector<8x128xf32>
    %c0_10 = arith.constant 0 : index
    %c0_11 = arith.constant 0 : index
    %16 = vector.load %arg12[%c0_10, %c0_11] : memref<8x32xf32, #tpu.memory_space<vmem>>, vector<8x32xf32>
    %17 = arith.negf %15 : vector<8x128xf32>
    %18 = math.exp %17 : vector<8x128xf32>
    %cst_12 = arith.constant 1.000000e+00 : f32
    %19 = vector.broadcast %cst_12 : f32 to vector<8x128xf32>
    %20 = arith.addf %19, %18 : vector<8x128xf32>
    %21 = arith.divf %19, %20 : vector<8x128xf32>
    %22 = vector.extract_strided_slice %21 {offsets = [0, 0], sizes = [8, 32], strides = [1, 1]} : vector<8x128xf32> to vector<8x32xf32>
    %23 = vector.extract_strided_slice %21 {offsets = [0, 32], sizes = [8, 32], strides = [1, 1]} : vector<8x128xf32> to vector<8x32xf32>
    %24 = vector.extract_strided_slice %21 {offsets = [0, 64], sizes = [8, 32], strides = [1, 1]} : vector<8x128xf32> to vector<8x32xf32>
    %cst_13 = arith.constant 2.000000e+00 : f32
    %25 = vector.broadcast %cst_13 : f32 to vector<8x32xf32>
    %26 = arith.mulf %25, %24 : vector<8x32xf32>
    %cst_14 = arith.constant 1.000000e+00 : f32
    %27 = vector.broadcast %cst_14 : f32 to vector<8x32xf32>
    %28 = arith.subf %26, %27 : vector<8x32xf32>
    %29 = vector.extract_strided_slice %21 {offsets = [0, 96], sizes = [8, 32], strides = [1, 1]} : vector<8x128xf32> to vector<8x32xf32>
    %30 = arith.mulf %23, %16 : vector<8x32xf32>
    %31 = arith.mulf %22, %28 : vector<8x32xf32>
    %32 = arith.addf %30, %31 : vector<8x32xf32>
    %33 = math.tanh %32 : vector<8x32xf32>
    %34 = arith.mulf %29, %33 : vector<8x32xf32>
    %c0_15 = arith.constant 0 : index
    %c0_16 = arith.constant 0 : index
    %35 = vector.load %arg10[%c0_15, %c0_16] : memref<8x32xf32, #tpu.memory_space<vmem>>, vector<8x32xf32>
    tpu.vector_store %arg10[%c0_15, %c0_16], %34 {strides = array<i32>} : memref<8x32xf32, #tpu.memory_space<vmem>>, vector<8x32xf32>,
    %c0_17 = arith.constant 0 : index
    %c0_18 = arith.constant 0 : index
    %36 = vector.load %arg12[%c0_17, %c0_18] : memref<8x32xf32, #tpu.memory_space<vmem>>, vector<8x32xf32>
    tpu.vector_store %arg12[%c0_17, %c0_18], %32 {strides = array<i32>} : memref<8x32xf32, #tpu.memory_space<vmem>>, vector<8x32xf32>,
    %c32 = arith.constant 32 : index
    %c0_19 = arith.constant 0 : index
    %37 = vector.load %arg4[%c32, %c0_19] : memref<128x128xf32, #tpu.memory_space<vmem>>, vector<32x128xf32>
    %cst_20 = arith.constant dense<0.000000e+00> : vector<8x128xf32>
    %38 = tpu.matmul %34, %37, %cst_20 {dimension_numbers = #tpu.dot_dimension_numbers<[1], [0], [0], [1], [0, 0, 1, 1], [], []>} : vector<8x32xf32>, vector<32x128xf32>, vector<8x128xf32> -> vector<8x128xf32>
    %c0_21 = arith.constant 0 : index
    %c0_22 = arith.constant 0 : index
    %39 = vector.load %arg11[%c0_21, %c0_22] : memref<8x32xf32, #tpu.memory_space<vmem>>, vector<8x32xf32>
    %c64 = arith.constant 64 : index
    %c0_23 = arith.constant 0 : index
    %40 = vector.load %arg4[%c64, %c0_23] : memref<128x128xf32, #tpu.memory_space<vmem>>, vector<32x128xf32>
    %cst_24 = arith.constant dense<0.000000e+00> : vector<8x128xf32>
    %41 = tpu.matmul %39, %40, %cst_24 {dimension_numbers = #tpu.dot_dimension_numbers<[1], [0], [0], [1], [0, 0, 1, 1], [], []>} : vector<8x32xf32>, vector<32x128xf32>, vector<8x128xf32> -> vector<8x128xf32>
    %42 = arith.addf %38, %41 : vector<8x128xf32>
    %c0_25 = arith.constant 0 : index
    %c0_26 = arith.constant 0 : index
    %43 = vector.load %arg6[%c0_25, %c0_26] : memref<16x128xf32, #tpu.memory_space<vmem>>, vector<8x128xf32>
    %44 = arith.addf %42, %43 : vector<8x128xf32>
    %c0_27 = arith.constant 0 : index
    %c0_28 = arith.constant 0 : index
    %45 = vector.load %arg13[%c0_27, %c0_28] : memref<8x32xf32, #tpu.memory_space<vmem>>, vector<8x32xf32>
    %46 = arith.negf %44 : vector<8x128xf32>
    %47 = math.exp %46 : vector<8x128xf32>
    %cst_29 = arith.constant 1.000000e+00 : f32
    %48 = vector.broadcast %cst_29 : f32 to vector<8x128xf32>
    %49 = arith.addf %48, %47 : vector<8x128xf32>
    %50 = arith.divf %48, %49 : vector<8x128xf32>
    %51 = vector.extract_strided_slice %50 {offsets = [0, 0], sizes = [8, 32], strides = [1, 1]} : vector<8x128xf32> to vector<8x32xf32>
    %52 = vector.extract_strided_slice %50 {offsets = [0, 32], sizes = [8, 32], strides = [1, 1]} : vector<8x128xf32> to vector<8x32xf32>
    %53 = vector.extract_strided_slice %50 {offsets = [0, 64], sizes = [8, 32], strides = [1, 1]} : vector<8x128xf32> to vector<8x32xf32>
    %cst_30 = arith.constant 2.000000e+00 : f32
    %54 = vector.broadcast %cst_30 : f32 to vector<8x32xf32>
    %55 = arith.mulf %54, %53 : vector<8x32xf32>
    %cst_31 = arith.constant 1.000000e+00 : f32
    %56 = vector.broadcast %cst_31 : f32 to vector<8x32xf32>
    %57 = arith.subf %55, %56 : vector<8x32xf32>
    %58 = vector.extract_strided_slice %50 {offsets = [0, 96], sizes = [8, 32], strides = [1, 1]} : vector<8x128xf32> to vector<8x32xf32>
    %59 = arith.mulf %52, %45 : vector<8x32xf32>
    %60 = arith.mulf %51, %57 : vector<8x32xf32>
    %61 = arith.addf %59, %60 : vector<8x32xf32>
    %62 = math.tanh %61 : vector<8x32xf32>
    %63 = arith.mulf %58, %62 : vector<8x32xf32>
    %c0_32 = arith.constant 0 : index
    %c0_33 = arith.constant 0 : index
    %64 = vector.load %arg11[%c0_32, %c0_33] : memref<8x32xf32, #tpu.memory_space<vmem>>, vector<8x32xf32>
    tpu.vector_store %arg11[%c0_32, %c0_33], %63 {strides = array<i32>} : memref<8x32xf32, #tpu.memory_space<vmem>>, vector<8x32xf32>,
    %c0_34 = arith.constant 0 : index
    %c0_35 = arith.constant 0 : index
    %65 = vector.load %arg13[%c0_34, %c0_35] : memref<8x32xf32, #tpu.memory_space<vmem>>, vector<8x32xf32>
    tpu.vector_store %arg13[%c0_34, %c0_35], %61 {strides = array<i32>} : memref<8x32xf32, #tpu.memory_space<vmem>>, vector<8x32xf32>,
    %c96 = arith.constant 96 : index
    %c0_36 = arith.constant 0 : index
    %66 = vector.load %arg4[%c96, %c0_36] : memref<128x128xf32, #tpu.memory_space<vmem>>, vector<32x128xf32>
    %cst_37 = arith.constant dense<0.000000e+00> : vector<8x128xf32>
    %67 = tpu.matmul %63, %66, %cst_37 {dimension_numbers = #tpu.dot_dimension_numbers<[1], [0], [0], [1], [0, 0, 1, 1], [], []>} : vector<8x32xf32>, vector<32x128xf32>, vector<8x128xf32> -> vector<8x128xf32>
    %c8 = arith.constant 8 : index
    %c0_38 = arith.constant 0 : index
    %68 = vector.load %arg6[%c8, %c0_38] : memref<16x128xf32, #tpu.memory_space<vmem>>, vector<8x128xf32>
    %69 = arith.addf %67, %68 : vector<8x128xf32>
    %cst_39 = arith.constant 0.000000e+00 : f32
    %70 = vector.broadcast %cst_39 : f32 to vector<8x128xf32>
    %71 = arith.maximumf %69, %70 : vector<8x128xf32>
    %c0_40 = arith.constant 0 : index
    %c0_41 = arith.constant 0 : index
    %72 = vector.load %arg5[%c0_40, %c0_41] : memref<128x128xf32, #tpu.memory_space<vmem>>, vector<128x128xf32>
    %cst_42 = arith.constant dense<0.000000e+00> : vector<8x128xf32>
    %73 = tpu.matmul %71, %72, %cst_42 {dimension_numbers = #tpu.dot_dimension_numbers<[1], [0], [0], [1], [0, 0, 1, 1], [], []>} : vector<8x128xf32>, vector<128x128xf32>, vector<8x128xf32> -> vector<8x128xf32>
    %c0_43 = arith.constant 0 : index
    %c0_44 = arith.constant 0 : index
    %74 = vector.load %arg7[%c0_43, %c0_44] : memref<8x128xf32, #tpu.memory_space<vmem>>, vector<8x128xf32>
    %75 = arith.addf %73, %74 : vector<8x128xf32>
    %c0_45 = arith.constant 0 : index
    %c0_46 = arith.constant 0 : index
    %c0_47 = arith.constant 0 : index
    %76 = vector.load %arg8[%c0_45, %c0_46, %c0_47] : memref<1x8x128xf32, #tpu.memory_space<vmem>>, vector<1x8x128xf32>
    %77 = vector.shape_cast %76 : vector<1x8x128xf32> to vector<8x128xf32>
    %78 = vector.shape_cast %75 : vector<8x128xf32> to vector<1x8x128xf32>
    tpu.vector_store %arg8[%c0_45, %c0_46, %c0_47], %78 {strides = array<i32>} : memref<1x8x128xf32, #tpu.memory_space<vmem>>, vector<1x8x128xf32>,
    %c0_i32_48 = arith.constant 0 : i32
    %79 = arith.cmpi eq, %arg0, %c0_i32_48 : i32
    %80 = arith.extui %79 : i1 to i32
    %c0_i32_49 = arith.constant 0 : i32
    %81 = arith.cmpi ne, %80, %c0_i32_49 : i32
    scf.if %81 {
      %82 = tpu.concatenate %34, %63, %32, %61 in 1 : vector<8x32xf32>, vector<8x32xf32>, vector<8x32xf32>, vector<8x32xf32> -> vector<8x128xf32>
      %c0_50 = arith.constant 0 : index
      %c0_51 = arith.constant 0 : index
      %83 = vector.load %arg9[%c0_50, %c0_51] : memref<8x128xf32, #tpu.memory_space<vmem>>, vector<8x128xf32>
      tpu.vector_store %arg9[%c0_50, %c0_51], %82 {strides = array<i32>} : memref<8x128xf32, #tpu.memory_space<vmem>>, vector<8x128xf32>,
    } else {
    }
    return
  }
  func.func @transform_0(%arg0: i32) -> (i32, i32, i32) {
    %c0_i32 = arith.constant 0 : i32
    %c0_i32_0 = arith.constant 0 : i32
    %c0_i32_1 = arith.constant 0 : i32
    return %arg0, %c0_i32, %c0_i32_0 : i32, i32, i32
  }
  func.func @transform_1(%arg0: i32) -> (i32, i32) {
    %c0_i32 = arith.constant 0 : i32
    %c0_i32_0 = arith.constant 0 : i32
    %c0_i32_1 = arith.constant 0 : i32
    return %c0_i32, %c0_i32_0 : i32, i32
  }
  func.func @transform_2(%arg0: i32) -> (i32, i32) {
    %c0_i32 = arith.constant 0 : i32
    %c0_i32_0 = arith.constant 0 : i32
    %c0_i32_1 = arith.constant 0 : i32
    return %c0_i32, %c0_i32_0 : i32, i32
  }
  func.func @transform_3(%arg0: i32) -> (i32, i32) {
    %c0_i32 = arith.constant 0 : i32
    %c0_i32_0 = arith.constant 0 : i32
    %c0_i32_1 = arith.constant 0 : i32
    return %c0_i32, %c0_i32_0 : i32, i32
  }
  func.func @transform_4(%arg0: i32) -> (i32, i32) {
    %c0_i32 = arith.constant 0 : i32
    %c0_i32_0 = arith.constant 0 : i32
    %c0_i32_1 = arith.constant 0 : i32
    return %c0_i32, %c0_i32_0 : i32, i32
  }
  func.func @transform_5(%arg0: i32) -> (i32, i32) {
    %c0_i32 = arith.constant 0 : i32
    %c0_i32_0 = arith.constant 0 : i32
    %c0_i32_1 = arith.constant 0 : i32
    return %c0_i32, %c0_i32_0 : i32, i32
  }
  func.func @transform_6(%arg0: i32) -> (i32, i32) {
    %c0_i32 = arith.constant 0 : i32
    %c0_i32_0 = arith.constant 0 : i32
    %c0_i32_1 = arith.constant 0 : i32
    return %c0_i32, %c0_i32_0 : i32, i32
  }
  func.func @transform_7(%arg0: i32) -> (i32, i32, i32) {
    %c0_i32 = arith.constant 0 : i32
    %c0_i32_0 = arith.constant 0 : i32
    %c0_i32_1 = arith.constant 0 : i32
    return %arg0, %c0_i32, %c0_i32_0 : i32, i32, i32
  }
  func.func @transform_8(%arg0: i32) -> (i32, i32) {
    %c0_i32 = arith.constant 0 : i32
    %c0_i32_0 = arith.constant 0 : i32
    %c0_i32_1 = arith.constant 0 : i32
    return %c0_i32, %c0_i32_0 : i32, i32
  }
}

</mosaic_0001>

<llo_original>
// kernel: caption_net_forward.1
$region0: #{caption_net_forward.1}
  #allocation0 [shape = 'u32[]', space=smem, size = 0x4, offset = 0x4, fixed_abs, tag = 'smem constant byte address 0x4 - core index']
  #allocation1 [shape = 'u32[144,128]{1,0:T(1,128)}', space=vmem, size = 0x12000, scoped, tag = 'internal scratch']
  #allocation2 [shape = 'f32[8,32]{1,0:T(8,128)}', space=vmem, size = 0x1000, scoped, tag = 'scratch operand']
  #allocation3 [shape = 'f32[8,32]{1,0:T(8,128)}', space=vmem, size = 0x1000, scoped, tag = 'scratch operand']
  #allocation4 [shape = 'f32[8,32]{1,0:T(8,128)}', space=vmem, size = 0x1000, scoped, tag = 'scratch operand']
  #allocation5 [shape = 'f32[8,32]{1,0:T(8,128)}', space=vmem, size = 0x1000, scoped, tag = 'scratch operand']
  %s0 = inlined_call_operand.vmem [shape: s32[1,8,1], index: 0, kind: input, shape index: {}]
  %s1 = inlined_call_operand.vmem [shape: f32[8,128], index: 1, kind: input, shape index: {}, may-alias: {1,8}]
  %s2 = inlined_call_operand.vmem [shape: f32[128,128], index: 2, kind: input, shape index: {}]
  %s3 = inlined_call_operand.hbm [shape: f32[128,128], index: 3, kind: input, shape index: {}]
  %s4 = inlined_call_operand.hbm [shape: f32[128,128], index: 4, kind: input, shape index: {}]
  %s5 = inlined_call_operand.hbm [shape: f32[16,128], index: 5, kind: input, shape index: {}]
  %s6 = inlined_call_operand.hbm [shape: f32[8,128], index: 6, kind: input, shape index: {}]
  %s7 = inlined_call_operand.hbm [shape: f32[1,8,128], index: 7, kind: output, shape index: {0}]
  %s8 = inlined_call_operand.vmem [shape: f32[8,128], index: 8, kind: output, shape index: {1}, may-alias: {1,8}]
  %9 = xla_tuple %s7, %s8
  %s10 = sld [smem:[#allocation0]]
  $region70: #{caption_net_forward.1} parent=0
    _
  %s12 = ssub.s32 1, %s10
  %s13 = scalar_select 0, %s12, %s10
  $region1: #{caption_net_forward.1} parent=0
    #allocation6 [shape = 'u8[65536]{0}', space=vmem, size = 0x10000, scoped, tag = 'input window, operand 3, single buffered']
    #allocation7 [shape = 's32[1]{0}', space=sflag, size = 0x4, scoped, tag = 'scoped memory for caption_net_forward.1']
    #allocation8 [shape = 's32[1]{0}', space=sflag, size = 0x4, scoped, tag = 'scoped memory for caption_net_forward.1']
    #allocation9 [shape = 'u8[65536]{0}', space=vmem, size = 0x10000, scoped, tag = 'input window, operand 4, single buffered']
    #allocation10 [shape = 's32[1]{0}', space=sflag, size = 0x4, scoped, tag = 'scoped memory for caption_net_forward.1']
    #allocation11 [shape = 'u8[8192]{0}', space=vmem, size = 0x2000, scoped, tag = 'input window, operand 5, single buffered']
    #allocation12 [shape = 'u8[4096]{0}', space=vmem, size = 0x1000, scoped, tag = 'input window, operand 6, single buffered']
    #allocation13 [shape = 's32[1]{0}', space=sflag, size = 0x4, scoped, tag = 'scoped memory for caption_net_forward.1']
    #allocation14 [shape = 'u8[4096]{0}', space=vmem, size = 0x1000, scoped, tag = 'output window, operand 0, single buffered']
    %14 = vsyncpa [#allocation7], 0
    %15 = vsyncpa [#allocation10], 0
    %16 = vsyncpa [#allocation13], 0
    %17 = vsyncpa [#allocation8], 0
    // Predicated region
    $region2: #{caption_net_forward.1} parent=1 // pred_check
      _
    $region3: #{caption_net_forward.1} parent=1 // pred_check_branch
      %19 = sbr.rel (0) target = $region5
    $region4: #{caption_net_forward.1} parent=1 // pred_region
      _
    $region5: #{caption_net_forward.1} parent=1 // pred_fallthru
      _
    // Predicated region
    $region6: #{caption_net_forward.1} parent=1 // pred_check
      _
    $region7: #{caption_net_forward.1} parent=1 // pred_check_branch
      %21 = sbr.rel (0) target = $region9
    $region8: #{caption_net_forward.1} parent=1 // pred_region
      _
    $region9: #{caption_net_forward.1} parent=1 // pred_fallthru
      _
    // Predicated region
    $region10: #{caption_net_forward.1} parent=1 // pred_check
      _
    $region11: #{caption_net_forward.1} parent=1 // pred_check_branch
      %23 = sbr.rel (0) target = $region13
    $region12: #{caption_net_forward.1} parent=1 // pred_region
      _
    $region13: #{caption_net_forward.1} parent=1 // pred_fallthru
      _
    // Predicated region
    $region14: #{caption_net_forward.1} parent=1 // pred_check
      _
    $region15: #{caption_net_forward.1} parent=1 // pred_check_branch
      %25 = sbr.rel (0) target = $region17
    $region16: #{caption_net_forward.1} parent=1 // pred_region
      %s27 = ssub.s32 2048, 2048
      %28 = vsyncadd [#allocation7], %s27
      %s29 = sshll.u32 [#allocation6], 4
      %s30 = int_to_ptr.vmem [resolvable:$true] %s29
      %35 = dma.hbm_to_vmem [thread:$0]  %s3, 2048, %s30, [#allocation7], 128, 128, 8
    $region17: #{caption_net_forward.1} parent=1 // pred_fallthru
      _
    // Predicated region
    $region18: #{caption_net_forward.1} parent=1 // pred_check
      _
    $region19: #{caption_net_forward.1} parent=1 // pred_check_branch
      %37 = sbr.rel (0) target = $region21
    $region20: #{caption_net_forward.1} parent=1 // pred_region
      %s39 = ssub.s32 2048, 2048
      %40 = vsyncadd [#allocation10], %s39
      %s41 = sshll.u32 [#allocation9], 4
      %s42 = int_to_ptr.vmem [resolvable:$true] %s41
      %47 = dma.hbm_to_vmem [thread:$0]  %s4, 2048, %s42, [#allocation10], 128, 128, 8
    $region21: #{caption_net_forward.1} parent=1 // pred_fallthru
      _
    // Predicated region
    $region22: #{caption_net_forward.1} parent=1 // pred_check
      _
    $region23: #{caption_net_forward.1} parent=1 // pred_check_branch
      %49 = sbr.rel (0) target = $region25
    $region24: #{caption_net_forward.1} parent=1 // pred_region
      %s51 = ssub.s32 256, 256
      %52 = vsyncadd [#allocation10], %s51
      %s53 = sshll.u32 [#allocation11], 4
      %s54 = int_to_ptr.vmem [resolvable:$true] %s53
      %59 = dma.hbm_to_vmem [thread:$0]  %s5, 256, %s54, [#allocation10], 128, 128, 8
    $region25: #{caption_net_forward.1} parent=1 // pred_fallthru
      _
    // Predicated region
    $region26: #{caption_net_forward.1} parent=1 // pred_check
      _
    $region27: #{caption_net_forward.1} parent=1 // pred_check_branch
      %61 = sbr.rel (0) target = $region29
    $region28: #{caption_net_forward.1} parent=1 // pred_region
      %s63 = ssub.s32 128, 128
      %64 = vsyncadd [#allocation13], %s63
      %s66 = sshll.u32 [#allocation12], 4
      %s67 = int_to_ptr.vmem [resolvable:$true] %s66
      %69 = dma.hbm_to_vmem [thread:$0]  %s6, 128, %s67, [#allocation13]
    $region29: #{caption_net_forward.1} parent=1 // pred_fallthru
      _
    // Predicated region
    $region30: #{caption_net_forward.1} parent=1 // pred_check
      _
    $region31: #{caption_net_forward.1} parent=1 // pred_check_branch
      %71 = sbr.rel (0) target = $region33
    $region32: #{caption_net_forward.1} parent=1 // pred_region
      %72 = dma.done [#allocation7], 2048
    $region33: #{caption_net_forward.1} parent=1 // pred_fallthru
      _
    // Predicated region
    $region34: #{caption_net_forward.1} parent=1 // pred_check
      _
    $region35: #{caption_net_forward.1} parent=1 // pred_check_branch
      %74 = sbr.rel (0) target = $region37
    $region36: #{caption_net_forward.1} parent=1 // pred_region
      %75 = dma.done [#allocation10], 2048
    $region37: #{caption_net_forward.1} parent=1 // pred_fallthru
      _
    // Predicated region
    $region38: #{caption_net_forward.1} parent=1 // pred_check
      _
    $region39: #{caption_net_forward.1} parent=1 // pred_check_branch
      %77 = sbr.rel (0) target = $region41
    $region40: #{caption_net_forward.1} parent=1 // pred_region
      %78 = dma.done [#allocation10], 256
    $region41: #{caption_net_forward.1} parent=1 // pred_fallthru
      _
    // Predicated region
    $region42: #{caption_net_forward.1} parent=1 // pred_check
      _
    $region43: #{caption_net_forward.1} parent=1 // pred_check_branch
      %80 = sbr.rel (0) target = $region45
    $region44: #{caption_net_forward.1} parent=1 // pred_region
      %81 = dma.done [#allocation13], 128
    $region45: #{caption_net_forward.1} parent=1 // pred_fallthru
      _
    %p82 = scmp.eq.s32.totalorder 0, 0
    // Predicated region
    $region46: #{caption_net_forward.1} parent=1 // pred_check
      %p83 = pneg %p82
    $region47: #{caption_net_forward.1} parent=1 // pred_check_branch
      %85 = sbr.rel (%p83) target = $region49
    $region48: #{caption_net_forward.1} parent=1 // pred_region
      %v86 = vld [vmem:[%s1] sm:$0xff]
      %vm87 = vcmask 261120
      %88 = vst.msk [vmem:[#allocation2] sm:$0xff] %vm87, %v86
      %90 = vrot.lane.b32.xlu0 %v86, 96
      %v91 = vpop.permute.xlu0 %90
      %93 = vst.msk [vmem:[#allocation3] sm:$0xff] %vm87, %v91
      %94 = vrot.lane.b32.xlu0 %v86, 64
      %v95 = vpop.permute.xlu0 %94
      %97 = vst.msk [vmem:[#allocation4] sm:$0xff] %vm87, %v95
      %98 = vrot.lane.b32.xlu0 %v86, 32
      %v99 = vpop.permute.xlu0 %98
      %101 = vst.msk [vmem:[#allocation5] sm:$0xff] %vm87, %v99
    $region49: #{caption_net_forward.1} parent=1 // pred_fallthru
      _
    %v102 = vld [vmem:[%s0] sm:$0xff]
    %v103 = vlaneseq
    %v104 = vand.u32 %v103, 127
    %105 = vset.pattern.permute.xlu0 0
    %106 = vperm.xlu0 %105, %v102
    %v107 = vpop.permute.xlu0 %106
    %vm108 = vcmp.eq.s32.totalorder %v104, %v107
    %v109 = vsel %vm108, 1, 0
    %v110 = vcvt.s32.f32 %v109
    %v111 = vld [vmem:[%s2] sm:$0xff]
    %v112 = vld [vmem:[%s2 + $0x8] sm:$0xff]
    %v113 = vld [vmem:[%s2 + $0x10] sm:$0xff]
    %v114 = vld [vmem:[%s2 + $0x18] sm:$0xff]
    %v115 = vld [vmem:[%s2 + $0x20] sm:$0xff]
    %v116 = vld [vmem:[%s2 + $0x28] sm:$0xff]
    %v117 = vld [vmem:[%s2 + $0x30] sm:$0xff]
    %v118 = vld [vmem:[%s2 + $0x38] sm:$0xff]
    %v119 = vld [vmem:[%s2 + $0x40] sm:$0xff]
    %v120 = vld [vmem:[%s2 + $0x48] sm:$0xff]
    %v121 = vld [vmem:[%s2 + $0x50] sm:$0xff]
    %v122 = vld [vmem:[%s2 + $0x58] sm:$0xff]
    %v123 = vld [vmem:[%s2 + $0x60] sm:$0xff]
    %v124 = vld [vmem:[%s2 + $0x68] sm:$0xff]
    %v125 = vld [vmem:[%s2 + $0x70] sm:$0xff]
    %v126 = vld [vmem:[%s2 + $0x78] sm:$0xff]
    %v127 = vld [vmem:[#allocation2] sm:$0xff]
    %v128 = vld [vmem:[#allocation6] sm:$0xff]
    %v129 = vld [vmem:[#allocation6 + $0x8] sm:$0xff]
    %v130 = vld [vmem:[#allocation6 + $0x10] sm:$0xff]
    %v131 = vld [vmem:[#allocation6 + $0x18] sm:$0xff]
    %vm132 = vcmask 261120
    %v134 = vsel %vm132, %v127, 0
    %136 = vmatprep.subr.mxu0 0.0
    %137 = vmatpush1.msra.mxu0 0.0
    %138 = vmatprep.subr.mxu0 0.0
    %139 = vmatpush1.msra.mxu0 0.0
    %140 = vmatprep.subr.mxu0 0.0
    %141 = vmatpush1.msra.mxu0 0.0
    %142 = vmatprep.subr.mxu0 0.0
    %143 = vmatpush1.msra.mxu0 0.0
    %144 = vmatprep.subr.mxu0 0.0
    %145 = vmatpush1.msra.mxu0 0.0
    %146 = vmatprep.subr.mxu0 0.0
    %147 = vmatpush1.msra.mxu0 0.0
    %148 = vmatprep.subr.mxu0 0.0
    %149 = vmatpush1.msra.mxu0 0.0
    %150 = vmatprep.subr.mxu0 0.0
    %151 = vmatpush1.msra.mxu0 0.0
    %152 = vmatprep.subr.mxu0 0.0
    %153 = vmatpush1.msra.mxu0 0.0
    %154 = vmatprep.subr.mxu0 0.0
    %155 = vmatpush1.msra.mxu0 0.0
    %156 = vmatprep.subr.mxu0 0.0
    %157 = vmatpush1.msra.mxu0 0.0
    %158 = vmatprep.subr.mxu0 0.0
    %159 = vmatpush1.msra.mxu0 0.0
    %160 = vmatprep.subr.mxu0 0.0
    %161 = vmatpush1.msra.mxu0 %v131
    %162 = vmatprep.subr.mxu0 0.0
    %163 = vmatpush1.msra.mxu0 %v130
    %164 = vmatprep.subr.mxu0 0.0
    %165 = vmatpush1.msra.mxu0 %v129
    %166 = vmatprep.subr.mxu0 0.0
    %167 = vmatpush1.msra.mxu0 %v128
    %168 = vmatprep.subr.mxu0 0.0
    %169 = vmatpush2.msra.mxu0 0.0
    %170 = vmatprep.subr.mxu0 0.0
    %171 = vmatpush2.msra.mxu0 0.0
    %172 = vmatprep.subr.mxu0 0.0
    %173 = vmatpush2.msra.mxu0 0.0
    %174 = vmatprep.subr.mxu0 0.0
    %175 = vmatpush2.msra.mxu0 0.0
    %176 = vmatprep.subr.mxu0 0.0
    %177 = vmatpush2.msra.mxu0 0.0
    %178 = vmatprep.subr.mxu0 0.0
    %179 = vmatpush2.msra.mxu0 0.0
    %180 = vmatprep.subr.mxu0 0.0
    %181 = vmatpush2.msra.mxu0 0.0
    %182 = vmatprep.subr.mxu0 0.0
    %183 = vmatpush2.msra.mxu0 0.0
    %184 = vmatprep.subr.mxu0 0.0
    %185 = vmatpush2.msra.mxu0 0.0
    %186 = vmatprep.subr.mxu0 0.0
    %187 = vmatpush2.msra.mxu0 0.0
    %188 = vmatprep.subr.mxu0 0.0
    %189 = vmatpush2.msra.mxu0 0.0
    %190 = vmatprep.subr.mxu0 0.0
    %191 = vmatpush2.msra.mxu0 0.0
    %192 = vmatprep.subr.mxu0 0.0
    %193 = vmatpush2.msra.mxu0 0.0
    %194 = vmatprep.subr.mxu0 0.0
    %195 = vmatpush2.msra.mxu0 0.0
    %196 = vmatprep.subr.mxu0 0.0
    %197 = vmatpush2.msra.mxu0 0.0
    %198 = vmatprep.subr.mxu0 0.0
    %199 = vmatpush2.msra.mxu0 0.0
    %200 = vmatprep.mubr.f32.mxu0 0.0
    %201 = vmatmul.mubr.f32.gmra.mxu0 %v134
    %v202 = vpop.f32.mrf.mxu0
    %v203 = vadd.f32 0.0, %v202
    %v204 = vpop.f32.mrf.mxu0
    %205 = vdwg.mxu0
    %206 = vmatprep.subr.mxu0 0.0
    %207 = vmatpush1.msra.mxu0 %v126
    %208 = vmatprep.subr.mxu0 0.0
    %209 = vmatpush1.msra.mxu0 %v125
    %210 = vmatprep.subr.mxu0 0.0
    %211 = vmatpush1.msra.mxu0 %v124
    %212 = vmatprep.subr.mxu0 0.0
    %213 = vmatpush1.msra.mxu0 %v123
    %214 = vmatprep.subr.mxu0 0.0
    %215 = vmatpush1.msra.mxu0 %v122
    %216 = vmatprep.subr.mxu0 0.0
    %217 = vmatpush1.msra.mxu0 %v121
    %218 = vmatprep.subr.mxu0 0.0
    %219 = vmatpush1.msra.mxu0 %v120
    %220 = vmatprep.subr.mxu0 0.0
    %221 = vmatpush1.msra.mxu0 %v119
    %222 = vmatprep.subr.mxu0 0.0
    %223 = vmatpush1.msra.mxu0 %v118
    %224 = vmatprep.subr.mxu0 0.0
    %225 = vmatpush1.msra.mxu0 %v117
    %226 = vmatprep.subr.mxu0 0.0
    %227 = vmatpush1.msra.mxu0 %v116
    %228 = vmatprep.subr.mxu0 0.0
    %229 = vmatpush1.msra.mxu0 %v115
    %230 = vmatprep.subr.mxu0 0.0
    %231 = vmatpush1.msra.mxu0 %v114
    %232 = vmatprep.subr.mxu0 0.0
    %233 = vmatpush1.msra.mxu0 %v113
    %234 = vmatprep.subr.mxu0 0.0
    %235 = vmatpush1.msra.mxu0 %v112
    %236 = vmatprep.subr.mxu0 0.0
    %237 = vmatpush1.msra.mxu0 %v111
    %238 = vmatprep.subr.mxu0 0.0
    %239 = vmatpush2.msra.mxu0 0.0
    %240 = vmatprep.subr.mxu0 0.0
    %241 = vmatpush2.msra.mxu0 0.0
    %242 = vmatprep.subr.mxu0 0.0
    %243 = vmatpush2.msra.mxu0 0.0
    %244 = vmatprep.subr.mxu0 0.0
    %245 = vmatpush2.msra.mxu0 0.0
    %246 = vmatprep.subr.mxu0 0.0
    %247 = vmatpush2.msra.mxu0 0.0
    %248 = vmatprep.subr.mxu0 0.0
    %249 = vmatpush2.msra.mxu0 0.0
    %250 = vmatprep.subr.mxu0 0.0
    %251 = vmatpush2.msra.mxu0 0.0
    %252 = vmatprep.subr.mxu0 0.0
    %253 = vmatpush2.msra.mxu0 0.0
    %254 = vmatprep.subr.mxu0 0.0
    %255 = vmatpush2.msra.mxu0 0.0
    %256 = vmatprep.subr.mxu0 0.0
    %257 = vmatpush2.msra.mxu0 0.0
    %258 = vmatprep.subr.mxu0 0.0
    %259 = vmatpush2.msra.mxu0 0.0
    %260 = vmatprep.subr.mxu0 0.0
    %261 = vmatpush2.msra.mxu0 0.0
    %262 = vmatprep.subr.mxu0 0.0
    %263 = vmatpush2.msra.mxu0 0.0
    %264 = vmatprep.subr.mxu0 0.0
    %265 = vmatpush2.msra.mxu0 0.0
    %266 = vmatprep.subr.mxu0 0.0
    %267 = vmatpush2.msra.mxu0 0.0
    %268 = vmatprep.subr.mxu0 0.0
    %269 = vmatpush2.msra.mxu0 0.0
    %270 = vmatprep.mubr.f32.mxu0 0.0
    %271 = vmatmul.mubr.f32.gmra.mxu0 %v110
    %v272 = vpop.f32.mrf.mxu0
    %v273 = vadd.f32 %v203, %v272
    %v274 = vpop.f32.mrf.mxu0
    %275 = vdwg.mxu0
    %v276 = vld [vmem:[#allocation4] sm:$0xff]
    %v277 = vxor.u32 %v273, 2147483648
    %v278 = vmul.f32 %v277, 1.442695
    %v279 = vpow.pop %v278
    %v280 = vadd.f32 %v279, 1.0
    %v281 = vrcp.pop %v280
    %v282 = vmul.f32 1.0, %v281
    %v283 = vmul.f32 %v282, 2.0
    %v284 = vsub.f32 %v283, 1.0
    %286 = vrot.lane.b32.xlu0 %v276, 32
    %v287 = vpop.permute.xlu0 %286
    %v289 = vmul.f32 %v282, %v287
    %291 = vrot.lane.b32.xlu0 %v284, 64
    %v292 = vpop.permute.xlu0 %291
    %v294 = vmul.f32 %v282, %v292
    %296 = vrot.lane.b32.xlu0 %v294, 32
    %v297 = vpop.permute.xlu0 %296
    %v299 = vadd.f32 %v289, %v297
    %v300 = vtanh.pop %v299
    %302 = vrot.lane.b32.xlu0 %v300, 64
    %v303 = vpop.permute.xlu0 %302
    %v305 = vmul.f32 %v282, %v303
    %307 = vrot.lane.b32.xlu0 %v305, 32
    %v308 = vpop.permute.xlu0 %307
    %310 = vst.msk [vmem:[#allocation2] sm:$0xff] %vm132, %v308
    %312 = vrot.lane.b32.xlu0 %v299, 96
    %v313 = vpop.permute.xlu0 %312
    %315 = vst.msk [vmem:[#allocation4] sm:$0xff] %vm132, %v313
    %v316 = vld [vmem:[#allocation6 + $0x20] sm:$0xff]
    %v317 = vld [vmem:[#allocation6 + $0x28] sm:$0xff]
    %v318 = vld [vmem:[#allocation6 + $0x30] sm:$0xff]
    %v319 = vld [vmem:[#allocation6 + $0x38] sm:$0xff]
    %v320 = vld [vmem:[#allocation3] sm:$0xff]
    %v321 = vld [vmem:[#allocation6 + $0x40] sm:$0xff]
    %v322 = vld [vmem:[#allocation6 + $0x48] sm:$0xff]
    %v323 = vld [vmem:[#allocation6 + $0x50] sm:$0xff]
    %v324 = vld [vmem:[#allocation6 + $0x58] sm:$0xff]
    %v326 = vsel %vm132, %v320, 0
    %328 = vmatprep.subr.mxu0 0.0
    %329 = vmatpush1.msra.mxu0 0.0
    %330 = vmatprep.subr.mxu0 0.0
    %331 = vmatpush1.msra.mxu0 0.0
    %332 = vmatprep.subr.mxu0 0.0
    %333 = vmatpush1.msra.mxu0 0.0
    %334 = vmatprep.subr.mxu0 0.0
    %335 = vmatpush1.msra.mxu0 0.0
    %336 = vmatprep.subr.mxu0 0.0
    %337 = vmatpush1.msra.mxu0 0.0
    %338 = vmatprep.subr.mxu0 0.0
    %339 = vmatpush1.msra.mxu0 0.0
    %340 = vmatprep.subr.mxu0 0.0
    %341 = vmatpush1.msra.mxu0 0.0
    %342 = vmatprep.subr.mxu0 0.0
    %343 = vmatpush1.msra.mxu0 0.0
    %344 = vmatprep.subr.mxu0 0.0
    %345 = vmatpush1.msra.mxu0 0.0
    %346 = vmatprep.subr.mxu0 0.0
    %347 = vmatpush1.msra.mxu0 0.0
    %348 = vmatprep.subr.mxu0 0.0
    %349 = vmatpush1.msra.mxu0 0.0
    %350 = vmatprep.subr.mxu0 0.0
    %351 = vmatpush1.msra.mxu0 0.0
    %352 = vmatprep.subr.mxu0 0.0
    %353 = vmatpush1.msra.mxu0 %v324
    %354 = vmatprep.subr.mxu0 0.0
    %355 = vmatpush1.msra.mxu0 %v323
    %356 = vmatprep.subr.mxu0 0.0
    %357 = vmatpush1.msra.mxu0 %v322
    %358 = vmatprep.subr.mxu0 0.0
    %359 = vmatpush1.msra.mxu0 %v321
    %360 = vmatprep.subr.mxu0 0.0
    %361 = vmatpush2.msra.mxu0 0.0
    %362 = vmatprep.subr.mxu0 0.0
    %363 = vmatpush2.msra.mxu0 0.0
    %364 = vmatprep.subr.mxu0 0.0
    %365 = vmatpush2.msra.mxu0 0.0
    %366 = vmatprep.subr.mxu0 0.0
    %367 = vmatpush2.msra.mxu0 0.0
    %368 = vmatprep.subr.mxu0 0.0
    %369 = vmatpush2.msra.mxu0 0.0
    %370 = vmatprep.subr.mxu0 0.0
    %371 = vmatpush2.msra.mxu0 0.0
    %372 = vmatprep.subr.mxu0 0.0
    %373 = vmatpush2.msra.mxu0 0.0
    %374 = vmatprep.subr.mxu0 0.0
    %375 = vmatpush2.msra.mxu0 0.0
    %376 = vmatprep.subr.mxu0 0.0
    %377 = vmatpush2.msra.mxu0 0.0
    %378 = vmatprep.subr.mxu0 0.0
    %379 = vmatpush2.msra.mxu0 0.0
    %380 = vmatprep.subr.mxu0 0.0
    %381 = vmatpush2.msra.mxu0 0.0
    %382 = vmatprep.subr.mxu0 0.0
    %383 = vmatpush2.msra.mxu0 0.0
    %384 = vmatprep.subr.mxu0 0.0
    %385 = vmatpush2.msra.mxu0 0.0
    %386 = vmatprep.subr.mxu0 0.0
    %387 = vmatpush2.msra.mxu0 0.0
    %388 = vmatprep.subr.mxu0 0.0
    %389 = vmatpush2.msra.mxu0 0.0
    %390 = vmatprep.subr.mxu0 0.0
    %391 = vmatpush2.msra.mxu0 0.0
    %392 = vmatprep.mubr.f32.mxu0 0.0
    %393 = vmatmul.mubr.f32.gmra.mxu0 %v326
    %v394 = vpop.f32.mrf.mxu0
    %v395 = vadd.f32 0.0, %v394
    %v396 = vpop.f32.mrf.mxu0
    %397 = vdwg.mxu0
    %v398 = vsel %vm132, %v308, 0
    %400 = vmatprep.subr.mxu0 0.0
    %401 = vmatpush1.msra.mxu0 0.0
    %402 = vmatprep.subr.mxu0 0.0
    %403 = vmatpush1.msra.mxu0 0.0
    %404 = vmatprep.subr.mxu0 0.0
    %405 = vmatpush1.msra.mxu0 0.0
    %406 = vmatprep.subr.mxu0 0.0
    %407 = vmatpush1.msra.mxu0 0.0
    %408 = vmatprep.subr.mxu0 0.0
    %409 = vmatpush1.msra.mxu0 0.0
    %410 = vmatprep.subr.mxu0 0.0
    %411 = vmatpush1.msra.mxu0 0.0
    %412 = vmatprep.subr.mxu0 0.0
    %413 = vmatpush1.msra.mxu0 0.0
    %414 = vmatprep.subr.mxu0 0.0
    %415 = vmatpush1.msra.mxu0 0.0
    %416 = vmatprep.subr.mxu0 0.0
    %417 = vmatpush1.msra.mxu0 0.0
    %418 = vmatprep.subr.mxu0 0.0
    %419 = vmatpush1.msra.mxu0 0.0
    %420 = vmatprep.subr.mxu0 0.0
    %421 = vmatpush1.msra.mxu0 0.0
    %422 = vmatprep.subr.mxu0 0.0
    %423 = vmatpush1.msra.mxu0 0.0
    %424 = vmatprep.subr.mxu0 0.0
    %425 = vmatpush1.msra.mxu0 %v319
    %426 = vmatprep.subr.mxu0 0.0
    %427 = vmatpush1.msra.mxu0 %v318
    %428 = vmatprep.subr.mxu0 0.0
    %429 = vmatpush1.msra.mxu0 %v317
    %430 = vmatprep.subr.mxu0 0.0
    %431 = vmatpush1.msra.mxu0 %v316
    %432 = vmatprep.subr.mxu0 0.0
    %433 = vmatpush2.msra.mxu0 0.0
    %434 = vmatprep.subr.mxu0 0.0
    %435 = vmatpush2.msra.mxu0 0.0
    %436 = vmatprep.subr.mxu0 0.0
    %437 = vmatpush2.msra.mxu0 0.0
    %438 = vmatprep.subr.mxu0 0.0
    %439 = vmatpush2.msra.mxu0 0.0
    %440 = vmatprep.subr.mxu0 0.0
    %441 = vmatpush2.msra.mxu0 0.0
    %442 = vmatprep.subr.mxu0 0.0
    %443 = vmatpush2.msra.mxu0 0.0
    %444 = vmatprep.subr.mxu0 0.0
    %445 = vmatpush2.msra.mxu0 0.0
    %446 = vmatprep.subr.mxu0 0.0
    %447 = vmatpush2.msra.mxu0 0.0
    %448 = vmatprep.subr.mxu0 0.0
    %449 = vmatpush2.msra.mxu0 0.0
    %450 = vmatprep.subr.mxu0 0.0
    %451 = vmatpush2.msra.mxu0 0.0
    %452 = vmatprep.subr.mxu0 0.0
    %453 = vmatpush2.msra.mxu0 0.0
    %454 = vmatprep.subr.mxu0 0.0
    %455 = vmatpush2.msra.mxu0 0.0
    %456 = vmatprep.subr.mxu0 0.0
    %457 = vmatpush2.msra.mxu0 0.0
    %458 = vmatprep.subr.mxu0 0.0
    %459 = vmatpush2.msra.mxu0 0.0
    %460 = vmatprep.subr.mxu0 0.0
    %461 = vmatpush2.msra.mxu0 0.0
    %462 = vmatprep.subr.mxu0 0.0
    %463 = vmatpush2.msra.mxu0 0.0
    %464 = vmatprep.mubr.f32.mxu0 0.0
    %465 = vmatmul.mubr.f32.gmra.mxu0 %v398
    %v466 = vpop.f32.mrf.mxu0
    %v467 = vadd.f32 %v395, %v466
    %v468 = vpop.f32.mrf.mxu0
    %469 = vdwg.mxu0
    %v470 = vld [vmem:[#allocation11] sm:$0xff]
    %v471 = vadd.f32 %v467, %v470
    %v472 = vld [vmem:[#allocation5] sm:$0xff]
    %v473 = vxor.u32 %v471, 2147483648
    %v474 = vmul.f32 %v473, 1.442695
    %v475 = vpow.pop %v474
    %v476 = vadd.f32 %v475, 1.0
    %v477 = vrcp.pop %v476
    %v478 = vmul.f32 1.0, %v477
    %v479 = vmul.f32 %v478, 2.0
    %v480 = vsub.f32 %v479, 1.0
    %482 = vrot.lane.b32.xlu0 %v472, 32
    %v483 = vpop.permute.xlu0 %482
    %v485 = vmul.f32 %v478, %v483
    %487 = vrot.lane.b32.xlu0 %v480, 64
    %v488 = vpop.permute.xlu0 %487
    %v490 = vmul.f32 %v478, %v488
    %492 = vrot.lane.b32.xlu0 %v490, 32
    %v493 = vpop.permute.xlu0 %492
    %v495 = vadd.f32 %v485, %v493
    %v496 = vtanh.pop %v495
    %498 = vrot.lane.b32.xlu0 %v496, 64
    %v499 = vpop.permute.xlu0 %498
    %v501 = vmul.f32 %v478, %v499
    %503 = vrot.lane.b32.xlu0 %v501, 32
    %v504 = vpop.permute.xlu0 %503
    %506 = vst.msk [vmem:[#allocation3] sm:$0xff] %vm132, %v504
    %508 = vrot.lane.b32.xlu0 %v495, 96
    %v509 = vpop.permute.xlu0 %508
    %511 = vst.msk [vmem:[#allocation5] sm:$0xff] %vm132, %v509
    %v512 = vld [vmem:[#allocation6 + $0x60] sm:$0xff]
    %v513 = vld [vmem:[#allocation6 + $0x68] sm:$0xff]
    %v514 = vld [vmem:[#allocation6 + $0x70] sm:$0xff]
    %v515 = vld [vmem:[#allocation6 + $0x78] sm:$0xff]
    %v516 = vld [vmem:[#allocation11 + $0x8] sm:$0xff]
    %v517 = vsel %vm132, %v504, 0
    %519 = vmatprep.subr.mxu0 0.0
    %520 = vmatpush1.msra.mxu0 0.0
    %521 = vmatprep.subr.mxu0 0.0
    %522 = vmatpush1.msra.mxu0 0.0
    %523 = vmatprep.subr.mxu0 0.0
    %524 = vmatpush1.msra.mxu0 0.0
    %525 = vmatprep.subr.mxu0 0.0
    %526 = vmatpush1.msra.mxu0 0.0
    %527 = vmatprep.subr.mxu0 0.0
    %528 = vmatpush1.msra.mxu0 0.0
    %529 = vmatprep.subr.mxu0 0.0
    %530 = vmatpush1.msra.mxu0 0.0
    %531 = vmatprep.subr.mxu0 0.0
    %532 = vmatpush1.msra.mxu0 0.0
    %533 = vmatprep.subr.mxu0 0.0
    %534 = vmatpush1.msra.mxu0 0.0
    %535 = vmatprep.subr.mxu0 0.0
    %536 = vmatpush1.msra.mxu0 0.0
    %537 = vmatprep.subr.mxu0 0.0
    %538 = vmatpush1.msra.mxu0 0.0
    %539 = vmatprep.subr.mxu0 0.0
    %540 = vmatpush1.msra.mxu0 0.0
    %541 = vmatprep.subr.mxu0 0.0
    %542 = vmatpush1.msra.mxu0 0.0
    %543 = vmatprep.subr.mxu0 0.0
    %544 = vmatpush1.msra.mxu0 %v515
    %545 = vmatprep.subr.mxu0 0.0
    %546 = vmatpush1.msra.mxu0 %v514
    %547 = vmatprep.subr.mxu0 0.0
    %548 = vmatpush1.msra.mxu0 %v513
    %549 = vmatprep.subr.mxu0 0.0
    %550 = vmatpush1.msra.mxu0 %v512
    %551 = vmatprep.subr.mxu0 0.0
    %552 = vmatpush2.msra.mxu0 0.0
    %553 = vmatprep.subr.mxu0 0.0
    %554 = vmatpush2.msra.mxu0 0.0
    %555 = vmatprep.subr.mxu0 0.0
    %556 = vmatpush2.msra.mxu0 0.0
    %557 = vmatprep.subr.mxu0 0.0
    %558 = vmatpush2.msra.mxu0 0.0
    %559 = vmatprep.subr.mxu0 0.0
    %560 = vmatpush2.msra.mxu0 0.0
    %561 = vmatprep.subr.mxu0 0.0
    %562 = vmatpush2.msra.mxu0 0.0
    %563 = vmatprep.subr.mxu0 0.0
    %564 = vmatpush2.msra.mxu0 0.0
    %565 = vmatprep.subr.mxu0 0.0
    %566 = vmatpush2.msra.mxu0 0.0
    %567 = vmatprep.subr.mxu0 0.0
    %568 = vmatpush2.msra.mxu0 0.0
    %569 = vmatprep.subr.mxu0 0.0
    %570 = vmatpush2.msra.mxu0 0.0
    %571 = vmatprep.subr.mxu0 0.0
    %572 = vmatpush2.msra.mxu0 0.0
    %573 = vmatprep.subr.mxu0 0.0
    %574 = vmatpush2.msra.mxu0 0.0
    %575 = vmatprep.subr.mxu0 0.0
    %576 = vmatpush2.msra.mxu0 0.0
    %577 = vmatprep.subr.mxu0 0.0
    %578 = vmatpush2.msra.mxu0 0.0
    %579 = vmatprep.subr.mxu0 0.0
    %580 = vmatpush2.msra.mxu0 0.0
    %581 = vmatprep.subr.mxu0 0.0
    %582 = vmatpush2.msra.mxu0 0.0
    %583 = vmatprep.mubr.f32.mxu0 0.0
    %584 = vmatmul.mubr.f32.gmra.mxu0 %v517
    %v585 = vpop.f32.mrf.mxu0
    %v586 = vadd.f32 %v516, %v585
    %v587 = vpop.f32.mrf.mxu0
    %588 = vdwg.mxu0
    %v589 = vmax.f32 %v586, 0.0
    %v590 = vld [vmem:[#allocation9] sm:$0xff]
    %v591 = vld [vmem:[#allocation9 + $0x8] sm:$0xff]
    %v592 = vld [vmem:[#allocation9 + $0x10] sm:$0xff]
    %v593 = vld [vmem:[#allocation9 + $0x18] sm:$0xff]
    %v594 = vld [vmem:[#allocation9 + $0x20] sm:$0xff]
    %v595 = vld [vmem:[#allocation9 + $0x28] sm:$0xff]
    %v596 = vld [vmem:[#allocation9 + $0x30] sm:$0xff]
    %v597 = vld [vmem:[#allocation9 + $0x38] sm:$0xff]
    %v598 = vld [vmem:[#allocation9 + $0x40] sm:$0xff]
    %v599 = vld [vmem:[#allocation9 + $0x48] sm:$0xff]
    %v600 = vld [vmem:[#allocation9 + $0x50] sm:$0xff]
    %v601 = vld [vmem:[#allocation9 + $0x58] sm:$0xff]
    %v602 = vld [vmem:[#allocation9 + $0x60] sm:$0xff]
    %v603 = vld [vmem:[#allocation9 + $0x68] sm:$0xff]
    %v604 = vld [vmem:[#allocation9 + $0x70] sm:$0xff]
    %v605 = vld [vmem:[#allocation9 + $0x78] sm:$0xff]
    %v606 = vld [vmem:[#allocation12] sm:$0xff]
    %607 = vmatprep.subr.mxu0 0.0
    %608 = vmatpush1.msra.mxu0 %v605
    %609 = vmatprep.subr.mxu0 0.0
    %610 = vmatpush1.msra.mxu0 %v604
    %611 = vmatprep.subr.mxu0 0.0
    %612 = vmatpush1.msra.mxu0 %v603
    %613 = vmatprep.subr.mxu0 0.0
    %614 = vmatpush1.msra.mxu0 %v602
    %615 = vmatprep.subr.mxu0 0.0
    %616 = vmatpush1.msra.mxu0 %v601
    %617 = vmatprep.subr.mxu0 0.0
    %618 = vmatpush1.msra.mxu0 %v600
    %619 = vmatprep.subr.mxu0 0.0
    %620 = vmatpush1.msra.mxu0 %v599
    %621 = vmatprep.subr.mxu0 0.0
    %622 = vmatpush1.msra.mxu0 %v598
    %623 = vmatprep.subr.mxu0 0.0
    %624 = vmatpush1.msra.mxu0 %v597
    %625 = vmatprep.subr.mxu0 0.0
    %626 = vmatpush1.msra.mxu0 %v596
    %627 = vmatprep.subr.mxu0 0.0
    %628 = vmatpush1.msra.mxu0 %v595
    %629 = vmatprep.subr.mxu0 0.0
    %630 = vmatpush1.msra.mxu0 %v594
    %631 = vmatprep.subr.mxu0 0.0
    %632 = vmatpush1.msra.mxu0 %v593
    %633 = vmatprep.subr.mxu0 0.0
    %634 = vmatpush1.msra.mxu0 %v592
    %635 = vmatprep.subr.mxu0 0.0
    %636 = vmatpush1.msra.mxu0 %v591
    %637 = vmatprep.subr.mxu0 0.0
    %638 = vmatpush1.msra.mxu0 %v590
    %639 = vmatprep.subr.mxu0 0.0
    %640 = vmatpush2.msra.mxu0 0.0
    %641 = vmatprep.subr.mxu0 0.0
    %642 = vmatpush2.msra.mxu0 0.0
    %643 = vmatprep.subr.mxu0 0.0
    %644 = vmatpush2.msra.mxu0 0.0
    %645 = vmatprep.subr.mxu0 0.0
    %646 = vmatpush2.msra.mxu0 0.0
    %647 = vmatprep.subr.mxu0 0.0
    %648 = vmatpush2.msra.mxu0 0.0
    %649 = vmatprep.subr.mxu0 0.0
    %650 = vmatpush2.msra.mxu0 0.0
    %651 = vmatprep.subr.mxu0 0.0
    %652 = vmatpush2.msra.mxu0 0.0
    %653 = vmatprep.subr.mxu0 0.0
    %654 = vmatpush2.msra.mxu0 0.0
    %655 = vmatprep.subr.mxu0 0.0
    %656 = vmatpush2.msra.mxu0 0.0
    %657 = vmatprep.subr.mxu0 0.0
    %658 = vmatpush2.msra.mxu0 0.0
    %659 = vmatprep.subr.mxu0 0.0
    %660 = vmatpush2.msra.mxu0 0.0
    %661 = vmatprep.subr.mxu0 0.0
    %662 = vmatpush2.msra.mxu0 0.0
    %663 = vmatprep.subr.mxu0 0.0
    %664 = vmatpush2.msra.mxu0 0.0
    %665 = vmatprep.subr.mxu0 0.0
    %666 = vmatpush2.msra.mxu0 0.0
    %667 = vmatprep.subr.mxu0 0.0
    %668 = vmatpush2.msra.mxu0 0.0
    %669 = vmatprep.subr.mxu0 0.0
    %670 = vmatpush2.msra.mxu0 0.0
    %671 = vmatprep.mubr.f32.mxu0 0.0
    %672 = vmatmul.mubr.f32.gmra.mxu0 %v589
    %v673 = vpop.f32.mrf.mxu0
    %v674 = vadd.f32 %v606, %v673
    %v675 = vpop.f32.mrf.mxu0
    %676 = vdwg.mxu0
    %677 = vst [vmem:[#allocation14] sm:$0xff] %v674
    // Predicated region
    $region50: #{caption_net_forward.1} parent=1 // pred_check
      %p678 = pneg %p82
    $region51: #{caption_net_forward.1} parent=1 // pred_check_branch
      %680 = sbr.rel (%p678) target = $region53
    $region52: #{caption_net_forward.1} parent=1 // pred_region
      %681 = vrot.lane.b32.xlu0 %v501, 64
      %v682 = vpop.permute.xlu0 %681
      %684 = vrot.lane.b32.xlu0 %v299, 32
      %v685 = vpop.permute.xlu0 %684
      %687 = vrot.lane.b32.xlu0 %v495, 64
      %v688 = vpop.permute.xlu0 %687
      %v690 = vsel %vm132, %v308, %v682
      %vm691 = vcmask 523264
      %v692 = vsel %vm691, %v690, %v685
      %vm693 = vcmask 785408
      %v694 = vsel %vm693, %v692, %v688
      %695 = vst [vmem:[%s8] sm:$0xff] %v694
    $region53: #{caption_net_forward.1} parent=1 // pred_fallthru
      _
    // Predicated region
    $region54: #{caption_net_forward.1} parent=1 // pred_check
      _
    $region55: #{caption_net_forward.1} parent=1 // pred_check_branch
      %697 = sbr.rel (0) target = $region57
    $region56: #{caption_net_forward.1} parent=1 // pred_region
      %s699 = ssub.s32 128, 128
      %700 = vsyncadd [#allocation8], %s699
      %s702 = sshll.u32 [#allocation14], 4
      %s703 = int_to_ptr.vmem [resolvable:$true] %s702
      %705 = dma.vmem_to_hbm [thread:$0]  %s703, 128, %s7, [#allocation8]
    $region57: #{caption_net_forward.1} parent=1 // pred_fallthru
      _
    // Predicated region
    $region58: #{caption_net_forward.1} parent=1 // pred_check
      _
    $region59: #{caption_net_forward.1} parent=1 // pred_check_branch
      %707 = sbr.rel (0) target = $region61
    $region60: #{caption_net_forward.1} parent=1 // pred_region
      _
    $region61: #{caption_net_forward.1} parent=1 // pred_fallthru
      _
    // Predicated region
    $region62: #{caption_net_forward.1} parent=1 // pred_check
      _
    $region63: #{caption_net_forward.1} parent=1 // pred_check_branch
      %709 = sbr.rel (0) target = $region65
    $region64: #{caption_net_forward.1} parent=1 // pred_region
      %710 = dma.done [#allocation8], 128
    $region65: #{caption_net_forward.1} parent=1 // pred_fallthru
      _
    // Predicated region
    $region66: #{caption_net_forward.1} parent=1 // pred_check
      _
    $region67: #{caption_net_forward.1} parent=1 // pred_check_branch
      %712 = sbr.rel (0) target = $region69
    $region68: #{caption_net_forward.1} parent=1 // pred_region
      _
    $region69: #{caption_net_forward.1} parent=1 // pred_fallthru
      _
    %713 = vsyncpa [#allocation7], 1
    %714 = vsyncpa [#allocation10], 1
    %715 = vsyncpa [#allocation13], 1
    %716 = vsyncpa [#allocation8], 1

</llo_original>
